<compile_context>
chip_gen: v7x
topology: tpu7x:2x2x1
jax: 0.10.0
libtpu: 0.0.40
codegen_flags: <defaults>
</compile_context>

<pallas_src>
import functools

import jax
import jax.numpy as jnp
from jax import lax
from jax.experimental import pallas as pl
from jax.experimental.pallas import tpu as pltpu

BN_EPS = 1e-5
ACT_DTYPE = jnp.bfloat16   # storage dtype for inter-kernel activations


def _row_tiling(n_rows, target):
    """Pick a row tile (multiple of 8, or the full extent) and padded row count."""
    if n_rows <= target:
        return n_rows, n_rows
    tile = target                      # target is a multiple of 8
    return tile, pl.cdiv(n_rows, tile) * tile


# ---------------------------------------------------------------------------
# Kernel 1: conv1 = 1x1x1 conv (BN scale pre-folded into w) + bias + ReLU.
# No residual argument (review: drop the zeros residual / its HBM traffic).
# ---------------------------------------------------------------------------
def _pw_conv1_kernel(x_ref, w_ref, b_ref, o_ref):
    y = jnp.dot(x_ref[...], w_ref[...], preferred_element_type=jnp.float32)
    y = y + b_ref[...]
    o_ref[...] = jnp.maximum(y, 0.0).astype(o_ref.dtype)


def pointwise_conv1(x2d, w_scaled, bias, *, out_dtype=ACT_DTYPE, row_tile=1024):
    M, cin = x2d.shape
    cout = w_scaled.shape[1]
    tm, m_pad = _row_tiling(M, row_tile)
    if m_pad != M:
        x2d = jnp.pad(x2d, ((0, m_pad - M), (0, 0)))
    out = pl.pallas_call(
        _pw_conv1_kernel,
        out_shape=jax.ShapeDtypeStruct((m_pad, cout), out_dtype),
        grid=(m_pad // tm,),
        in_specs=[
            pl.BlockSpec((tm, cin), lambda i: (i, 0)),
            pl.BlockSpec((cin, cout), lambda i: (0, 0)),
            pl.BlockSpec((1, cout), lambda i: (0, 0)),
        ],
        out_specs=pl.BlockSpec((tm, cout), lambda i: (i, 0)),
        compiler_params=pltpu.CompilerParams(dimension_semantics=("parallel",)),
    )(x2d, w_scaled, bias.reshape(1, cout))
    return out[:M] if m_pad != M else out


# ---------------------------------------------------------------------------
# Kernel 2: 3x3x3 depthwise conv (groups=planes, stride 1, pad 1) + folded BN,
# tiled one T-slice per grid step, with the SE global pool (sum over T,H,W)
# fused in as a second, revisited accumulator output.
# The T halo is expressed as three blocked views of the T-padded input
# (T-block size 1 at t, t+1, t+2), so no overlapping BlockSpecs are needed.
# TODO(synk): fold the H/W halo padding into the kernel (masked taps /
# pltpu.roll) to avoid the single padded-copy materialization on the host.
# ---------------------------------------------------------------------------
def _dw_conv_bn_pool_kernel(xm_ref, xc_ref, xp_ref, w_ref, b_ref,
                            o_ref, pool_ref, *, H, W):
    @pl.when(pl.program_id(1) == 0)
    def _():
        pool_ref[...] = jnp.zeros_like(pool_ref)

    wk = w_ref[...]                       # (3,3,3,C), BN scale already folded in

    def plane_taps(x_slab, dt):
        x = x_slab.astype(jnp.float32)    # (H+2, W+2, C)
        acc = x[0:H, 0:W, :] * wk[dt, 0, 0, :]
        for dh in range(3):
            for dw in range(3):
                if dh == 0 and dw == 0:
                    continue
                acc = acc + x[dh:dh + H, dw:dw + W, :] * wk[dt, dh, dw, :]
        return acc

    y = plane_taps(xm_ref[0, 0], 0)
    y = y + plane_taps(xc_ref[0, 0], 1)
    y = y + plane_taps(xp_ref[0, 0], 2)
    y = y + b_ref[0]

    o_ref[0, 0] = y.astype(o_ref.dtype)
    pool_ref[0, 0] = pool_ref[0, 0] + jnp.sum(y, axis=(0, 1))


def depthwise3x3x3_bn_pool(x, w_scaled, bias, *, out_dtype=ACT_DTYPE):
    """x: (N,T,H,W,C). Returns (dw_out (N,T,H,W,C), pool_sum (N,1,C) f32)."""
    N, T, H, W, C = x.shape
    xpad = jnp.pad(x, ((0, 0), (1, 1), (1, 1), (1, 1), (0, 0)))  # (N,T+2,H+2,W+2,C)
    kern = functools.partial(_dw_conv_bn_pool_kernel, H=H, W=W)
    slab_shape = (1, 1, H + 2, W + 2, C)
    out, pool_sum = pl.pallas_call(
        kern,
        out_shape=(jax.ShapeDtypeStruct((N, T, H, W, C), out_dtype),
                   jax.ShapeDtypeStruct((N, 1, C), jnp.float32)),
        grid=(N, T),
        in_specs=[
            pl.BlockSpec(slab_shape, lambda n, t: (n, t, 0, 0, 0)),       # t-1 (padded)
            pl.BlockSpec(slab_shape, lambda n, t: (n, t + 1, 0, 0, 0)),   # t
            pl.BlockSpec(slab_shape, lambda n, t: (n, t + 2, 0, 0, 0)),   # t+1
            pl.BlockSpec((3, 3, 3, C), lambda n, t: (0, 0, 0, 0)),
            pl.BlockSpec((1, C), lambda n, t: (0, 0)),
        ],
        out_specs=(pl.BlockSpec((1, 1, H, W, C), lambda n, t: (n, t, 0, 0, 0)),
                   pl.BlockSpec((1, 1, C), lambda n, t: (n, 0, 0))),
        compiler_params=pltpu.CompilerParams(
            dimension_semantics=("parallel", "arbitrary")),
    )(xpad, xpad, xpad, w_scaled, bias.reshape(1, C))
    return out, pool_sum


# ---------------------------------------------------------------------------
# Kernel 3: fused SE gate * x, Swish, conv3 1x1x1 matmul (BN scale folded into
# w) + bias, residual add, final ReLU.  Grid is (N, spatial tiles) so the
# per-batch SE gate is indexed directly via its BlockSpec.
# ---------------------------------------------------------------------------
def _pw_conv3_kernel(x_ref, g_ref, w_ref, b_ref, r_ref, o_ref, *, use_swish):
    z = x_ref[0].astype(jnp.float32) * g_ref[0]          # (ts, C) * (1, C)
    if use_swish:
        z = z * jax.nn.sigmoid(z)                        # Swish on EUP slot
    y = jnp.dot(z, w_ref[...], preferred_element_type=jnp.float32)
    y = y + b_ref[...] + r_ref[0]
    o_ref[0] = jnp.maximum(y, 0.0).astype(o_ref.dtype)


def pointwise_conv3(x3d, gate, w_scaled, bias, residual, *, use_swish,
                    row_tile=1024):
    N, S, cinp = x3d.shape
    cout = w_scaled.shape[1]
    ts, s_pad = _row_tiling(S, row_tile)
    if s_pad != S:
        x3d = jnp.pad(x3d, ((0, 0), (0, s_pad - S), (0, 0)))
        residual = jnp.pad(residual, ((0, 0), (0, s_pad - S), (0, 0)))
    kern = functools.partial(_pw_conv3_kernel, use_swish=use_swish)
    out = pl.pallas_call(
        kern,
        out_shape=jax.ShapeDtypeStruct((N, s_pad, cout), jnp.float32),
        grid=(N, s_pad // ts),
        in_specs=[
            pl.BlockSpec((1, ts, cinp), lambda n, s: (n, s, 0)),
            pl.BlockSpec((1, 1, cinp), lambda n, s: (n, 0, 0)),
            pl.BlockSpec((cinp, cout), lambda n, s: (0, 0)),
            pl.BlockSpec((1, cout), lambda n, s: (0, 0)),
            pl.BlockSpec((1, ts, cout), lambda n, s: (n, s, 0)),
        ],
        out_specs=pl.BlockSpec((1, ts, cout), lambda n, s: (n, s, 0)),
        compiler_params=pltpu.CompilerParams(
            dimension_semantics=("parallel", "parallel")),
    )(x3d, gate, w_scaled, bias.reshape(1, cout), residual)
    return out[:, :S] if s_pad != S else out


# ---------------------------------------------------------------------------
# Parameter construction (deterministic, synthetic) and forward pass.
# ---------------------------------------------------------------------------
def round_width(width, multiplier, min_width=8, divisor=8):
    width *= multiplier
    width_out = max(min_width, int(width + divisor / 2) // divisor * divisor)
    if width_out < 0.9 * width:
        width_out += divisor
    return int(width_out)


def init_params(key, inplanes, planes, outplanes, se_ratio):
    ks = jax.random.split(key, 20)

    def bn(i, c):
        gamma = jax.random.uniform(ks[i], (c,), jnp.float32, 0.8, 1.2)
        beta = 0.1 * jax.random.normal(ks[i + 1], (c,), jnp.float32)
        mean = 0.1 * jax.random.normal(ks[i + 2], (c,), jnp.float32)
        var = jax.random.uniform(ks[i + 3], (c,), jnp.float32, 0.5, 1.5)
        scale = gamma / jnp.sqrt(var + BN_EPS)
        bias = beta - mean * scale
        return scale, bias

    p = {}
    p["w1"] = 0.2 * jax.random.normal(ks[0], (inplanes, planes), jnp.float32)
    p["bn1"] = bn(1, planes)
    p["w2"] = 0.2 * jax.random.normal(ks[5], (3, 3, 3, planes), jnp.float32)
    p["bn2"] = bn(6, planes)
    p["w3"] = 0.2 * jax.random.normal(ks[10], (planes, outplanes), jnp.float32)
    p["bn3"] = bn(11, outplanes)
    if se_ratio is not None:
        bneck = round_width(planes, se_ratio)
        p["se_w1"] = 0.2 * jax.random.normal(ks[15], (planes, bneck), jnp.float32)
        p["se_b1"] = 0.1 * jax.random.normal(ks[16], (bneck,), jnp.float32)
        p["se_w2"] = 0.2 * jax.random.normal(ks[17], (bneck, planes), jnp.float32)
        p["se_b2"] = 0.1 * jax.random.normal(ks[18], (planes,), jnp.float32)
    return p


def block_x3d_forward(x_ncdhw, params, *, se_ratio=None, use_swish=True,
                      spatial_stride=1, downsample=None):
    # TODO(synk): spatial_stride > 1 and the downsample branch are not
    # implemented (module defaults: stride=1, downsample=None).
    assert spatial_stride == 1 and downsample is None
    x = jnp.transpose(x_ncdhw, (0, 2, 3, 4, 1)).astype(jnp.float32)  # NDHWC
    N, T, H, W, cin = x.shape
    planes = params["w1"].shape[1]
    outplanes = params["w3"].shape[1]
    assert cin == outplanes, "identity residual requires inplanes == outplanes"
    S = T * H * W
    M = N * S

    # Fold BN scale into the conv weights on the host; kernels only add bias.
    s1, b1 = params["bn1"]
    s2, b2 = params["bn2"]
    s3, b3 = params["bn3"]
    w1s = params["w1"] * s1[None, :]
    w2s = params["w2"] * s2                    # (3,3,3,planes) * (planes,)
    w3s = params["w3"] * s3[None, :]

    # conv1: 1x1x1 conv + BN + ReLU  (bf16 activation out, no zero residual)
    out1 = pointwise_conv1(x.reshape(M, cin), w1s, b1)
    out1 = out1.reshape(N, T, H, W, planes)

    # conv2: 3x3x3 depthwise conv + BN, with the SE global pool fused in.
    out2, pool_sum = depthwise3x3x3_bn_pool(out1, w2s, b2)

    # SE gate: tiny (N, C)-sized FC layers are plain-JAX glue.
    if se_ratio is not None:
        pooled = pool_sum.reshape(N, planes) / float(S)
        h = jnp.maximum(pooled @ params["se_w1"] + params["se_b1"], 0.0)
        gate = jax.nn.sigmoid(h @ params["se_w2"] + params["se_b2"])
    else:
        gate = jnp.ones((N, planes), jnp.float32)
    gate = gate.reshape(N, 1, planes)

    # conv3: gate * x, Swish, 1x1x1 conv + BN, residual add, final ReLU (fused).
    y = pointwise_conv3(out2.reshape(N, S, planes), gate, w3s, b3,
                        x.reshape(N, S, cin), use_swish=use_swish)
    y = y.reshape(N, T, H, W, outplanes)
    return jnp.transpose(y, (0, 4, 1, 2, 3))  # back to NCDHW


# ---------------------------------------------------------------------------
# Pure-JAX reference (lax.conv_general_dilated, NCDHW, f32) for validation.
# ---------------------------------------------------------------------------
def reference_forward(x, params, *, se_ratio, use_swish):
    x = x.astype(jnp.float32)
    planes = params["w1"].shape[1]
    outplanes = params["w3"].shape[1]
    dn = ("NCDHW", "OIDHW", "NCDHW")

    def bn_apply(y, sb):
        s, b = sb
        return y * s[None, :, None, None, None] + b[None, :, None, None, None]

    w1 = params["w1"].T.reshape(planes, -1, 1, 1, 1)
    out = lax.conv_general_dilated(x, w1, (1, 1, 1), "VALID", dimension_numbers=dn)
    out = jnp.maximum(bn_apply(out, params["bn1"]), 0.0)

    w2 = jnp.transpose(params["w2"], (3, 0, 1, 2))[:, None]  # (planes,1,3,3,3)
    out = lax.conv_general_dilated(out, w2, (1, 1, 1),
                                   ((1, 1), (1, 1), (1, 1)),
                                   dimension_numbers=dn,
                                   feature_group_count=planes)
    out = bn_apply(out, params["bn2"])

    if se_ratio is not None:
        pooled = jnp.mean(out, axis=(2, 3, 4))
        h = jnp.maximum(pooled @ params["se_w1"] + params["se_b1"], 0.0)
        gate = jax.nn.sigmoid(h @ params["se_w2"] + params["se_b2"])
        out = out * gate[:, :, None, None, None]
    if use_swish:
        out = out * jax.nn.sigmoid(out)

    w3 = params["w3"].T.reshape(outplanes, planes, 1, 1, 1)
    out = lax.conv_general_dilated(out, w3, (1, 1, 1), "VALID", dimension_numbers=dn)
    out = bn_apply(out, params["bn3"])
    out = out + x
    return jnp.maximum(out, 0.0)


if __name__ == "__main__":
    inplanes, planes, outplanes = 8, 16, 8
    se_ratio, use_swish = 0.25, True
    N, T, H, W = 2, 4, 8, 8

    key = jax.random.PRNGKey(0)
    kx, kp = jax.random.split(key)
    x = jax.random.normal(kx, (N, inplanes, T, H, W), jnp.float32)  # NCDHW
    params = init_params(kp, inplanes, planes, outplanes, se_ratio)

    out = block_x3d_forward(x, params, se_ratio=se_ratio, use_swish=use_swish)
    out = jax.block_until_ready(out)

    ref = reference_forward(x, params, se_ratio=se_ratio, use_swish=use_swish)
    # Tolerance accounts for bf16 storage of the intermediate activations.
    err = jnp.abs(out - ref)
    tol = 5e-2 + 2e-2 * jnp.abs(ref)
    if not bool(jnp.all(err <= tol)):
        raise AssertionError(
            f"Pallas output mismatch vs reference: max abs err {float(jnp.max(err))}")

    print("KERNEL_OK")
</pallas_src>

<mosaic_0001>
module attributes {stable_mosaic.version = 11 : i64} {
  func.func @_pw_conv1_kernel(%arg0: i32, %arg1: memref<512x8xf32, #tpu.memory_space<vmem>>, %arg2: memref<8x16xf32, #tpu.memory_space<vmem>>, %arg3: memref<1x16xf32, #tpu.memory_space<vmem>>, %arg4: memref<512x16xbf16, #tpu.memory_space<vmem>>) attributes {dimension_semantics = [#tpu.dimension_semantics<parallel>], iteration_bounds = array<i64: 1>, scalar_prefetch = 0 : i64, scratch_operands = 0 : i64, tpu.core_type = #tpu.core_type<tc>, window_params = [{transform_indices = @transform_0, window_bounds = array<i64: 512, 8>}, {pipeline_mode = #tpu.pipeline_mode<synchronous>, transform_indices = @transform_1, window_bounds = array<i64: 8, 16>}, {pipeline_mode = #tpu.pipeline_mode<synchronous>, transform_indices = @transform_2, window_bounds = array<i64: 1, 16>}, {transform_indices = @transform_3, window_bounds = array<i64: 512, 16>}]} {
    %c0 = arith.constant 0 : index
    %c0_0 = arith.constant 0 : index
    %0 = vector.load %arg1[%c0, %c0_0] : memref<512x8xf32, #tpu.memory_space<vmem>>, vector<512x8xf32>
    %c0_1 = arith.constant 0 : index
    %c0_2 = arith.constant 0 : index
    %1 = vector.load %arg2[%c0_1, %c0_2] : memref<8x16xf32, #tpu.memory_space<vmem>>, vector<8x16xf32>
    %cst = arith.constant dense<0.000000e+00> : vector<512x16xf32>
    %2 = tpu.matmul %0, %1, %cst {dimension_numbers = #tpu.dot_dimension_numbers<[1], [0], [0], [1], [0, 0, 1, 1], [], []>} : vector<512x8xf32>, vector<8x16xf32>, vector<512x16xf32> -> vector<512x16xf32>
    %c0_3 = arith.constant 0 : index
    %c0_4 = arith.constant 0 : index
    %3 = vector.load %arg3[%c0_3, %c0_4] : memref<1x16xf32, #tpu.memory_space<vmem>>, vector<1x16xf32>
    %4 = vector.broadcast %3 : vector<1x16xf32> to vector<512x16xf32>
    %5 = arith.addf %2, %4 : vector<512x16xf32>
    %cst_5 = arith.constant 0.000000e+00 : f32
    %6 = vector.broadcast %cst_5 : f32 to vector<512x16xf32>
    %7 = arith.maximumf %5, %6 : vector<512x16xf32>
    %8 = arith.truncf %7 : vector<512x16xf32> to vector<512x16xbf16>
    %c0_6 = arith.constant 0 : index
    %c0_7 = arith.constant 0 : index
    %9 = vector.load %arg4[%c0_6, %c0_7] : memref<512x16xbf16, #tpu.memory_space<vmem>>, vector<512x16xbf16>
    tpu.vector_store %arg4[%c0_6, %c0_7], %8 {strides = array<i32>} : memref<512x16xbf16, #tpu.memory_space<vmem>>, vector<512x16xbf16>,
    return
  }
  func.func @transform_0(%arg0: i32) -> (i32, i32) {
    %c0_i32 = arith.constant 0 : i32
    %c0_i32_0 = arith.constant 0 : i32
    return %arg0, %c0_i32 : i32, i32
  }
  func.func @transform_1(%arg0: i32) -> (i32, i32) {
    %c0_i32 = arith.constant 0 : i32
    %c0_i32_0 = arith.constant 0 : i32
    %c0_i32_1 = arith.constant 0 : i32
    return %c0_i32, %c0_i32_0 : i32, i32
  }
  func.func @transform_2(%arg0: i32) -> (i32, i32) {
    %c0_i32 = arith.constant 0 : i32
    %c0_i32_0 = arith.constant 0 : i32
    %c0_i32_1 = arith.constant 0 : i32
    return %c0_i32, %c0_i32_0 : i32, i32
  }
  func.func @transform_3(%arg0: i32) -> (i32, i32) {
    %c0_i32 = arith.constant 0 : i32
    %c0_i32_0 = arith.constant 0 : i32
    return %arg0, %c0_i32 : i32, i32
  }
}

</mosaic_0001>

<llo_original>
// kernel: tpu_custom_call.1
$region0: #{tpu_custom_call.1}
  #allocation0 [shape = 'u32[]', space=smem, size = 0x4, offset = 0x4, fixed_abs, tag = 'smem constant byte address 0x4 - core index']
  #allocation1 [shape = 'u32[144,128]{1,0:T(1,128)}', space=vmem, size = 0x12000, scoped, tag = 'internal scratch']
  %s0 = inlined_call_operand.vmem [shape: f32[512,8], index: 0, kind: input, shape index: {}]
  %s1 = inlined_call_operand.vmem [shape: f32[8,16], index: 1, kind: input, shape index: {}]
  %s2 = inlined_call_operand.vmem [shape: f32[1,16], index: 2, kind: input, shape index: {}]
  %s3 = inlined_call_operand.vmem [shape: bf16[512,16], index: 3, kind: output, shape index: {}]
  %s4 = sld [smem:[#allocation0]]
  $region22: #{tpu_custom_call.1} parent=0
    _
  %s6 = ssub.s32 1, %s4
  %s7 = scalar_select 0, %s6, %s4
  // Predicated region
  $region2: #{tpu_custom_call.1} parent=0 // pred_check
    _
  $region3: #{tpu_custom_call.1} parent=0 // pred_check_branch
    %9 = sbr.rel (0) target = $region5
  $region4: #{tpu_custom_call.1} parent=0 // pred_region
    _
  $region5: #{tpu_custom_call.1} parent=0 // pred_fallthru
    _
  // Predicated region
  $region6: #{tpu_custom_call.1} parent=0 // pred_check
    _
  $region7: #{tpu_custom_call.1} parent=0 // pred_check_branch
    %11 = sbr.rel (0) target = $region9
  $region8: #{tpu_custom_call.1} parent=0 // pred_region
    _
  $region9: #{tpu_custom_call.1} parent=0 // pred_fallthru
    _
  // Predicated region
  $region10: #{tpu_custom_call.1} parent=0 // pred_check
    _
  $region11: #{tpu_custom_call.1} parent=0 // pred_check_branch
    %13 = sbr.rel (0) target = $region13
  $region12: #{tpu_custom_call.1} parent=0 // pred_region
    _
  $region13: #{tpu_custom_call.1} parent=0 // pred_fallthru
    _
  %v14 = vld [vmem:[%s0] sm:$0xff]
  %v15 = vld [vmem:[%s0 + $0x8] sm:$0xff]
  %v16 = vld [vmem:[%s0 + $0x10] sm:$0xff]
  %v17 = vld [vmem:[%s0 + $0x18] sm:$0xff]
  %v18 = vld [vmem:[%s0 + $0x20] sm:$0xff]
  %v19 = vld [vmem:[%s0 + $0x28] sm:$0xff]
  %v20 = vld [vmem:[%s0 + $0x30] sm:$0xff]
  %v21 = vld [vmem:[%s0 + $0x38] sm:$0xff]
  %v22 = vld [vmem:[%s0 + $0x40] sm:$0xff]
  %v23 = vld [vmem:[%s0 + $0x48] sm:$0xff]
  %v24 = vld [vmem:[%s0 + $0x50] sm:$0xff]
  %v25 = vld [vmem:[%s0 + $0x58] sm:$0xff]
  %v26 = vld [vmem:[%s0 + $0x60] sm:$0xff]
  %v27 = vld [vmem:[%s0 + $0x68] sm:$0xff]
  %v28 = vld [vmem:[%s0 + $0x70] sm:$0xff]
  %v29 = vld [vmem:[%s0 + $0x78] sm:$0xff]
  %v30 = vld [vmem:[%s0 + $0x80] sm:$0xff]
  %v31 = vld [vmem:[%s0 + $0x88] sm:$0xff]
  %v32 = vld [vmem:[%s0 + $0x90] sm:$0xff]
  %v33 = vld [vmem:[%s0 + $0x98] sm:$0xff]
  %v34 = vld [vmem:[%s0 + $0xa0] sm:$0xff]
  %v35 = vld [vmem:[%s0 + $0xa8] sm:$0xff]
  %v36 = vld [vmem:[%s0 + $0xb0] sm:$0xff]
  %v37 = vld [vmem:[%s0 + $0xb8] sm:$0xff]
  %v38 = vld [vmem:[%s0 + $0xc0] sm:$0xff]
  %v39 = vld [vmem:[%s0 + $0xc8] sm:$0xff]
  %v40 = vld [vmem:[%s0 + $0xd0] sm:$0xff]
  %v41 = vld [vmem:[%s0 + $0xd8] sm:$0xff]
  %v42 = vld [vmem:[%s0 + $0xe0] sm:$0xff]
  %v43 = vld [vmem:[%s0 + $0xe8] sm:$0xff]
  %v44 = vld [vmem:[%s0 + $0xf0] sm:$0xff]
  %v45 = vld [vmem:[%s0 + $0xf8] sm:$0xff]
  %v46 = vld [vmem:[%s0 + $0x100] sm:$0xff]
  %v47 = vld [vmem:[%s0 + $0x108] sm:$0xff]
  %v48 = vld [vmem:[%s0 + $0x110] sm:$0xff]
  %v49 = vld [vmem:[%s0 + $0x118] sm:$0xff]
  %v50 = vld [vmem:[%s0 + $0x120] sm:$0xff]
  %v51 = vld [vmem:[%s0 + $0x128] sm:$0xff]
  %v52 = vld [vmem:[%s0 + $0x130] sm:$0xff]
  %v53 = vld [vmem:[%s0 + $0x138] sm:$0xff]
  %v54 = vld [vmem:[%s0 + $0x140] sm:$0xff]
  %v55 = vld [vmem:[%s0 + $0x148] sm:$0xff]
  %v56 = vld [vmem:[%s0 + $0x150] sm:$0xff]
  %v57 = vld [vmem:[%s0 + $0x158] sm:$0xff]
  %v58 = vld [vmem:[%s0 + $0x160] sm:$0xff]
  %v59 = vld [vmem:[%s0 + $0x168] sm:$0xff]
  %v60 = vld [vmem:[%s0 + $0x170] sm:$0xff]
  %v61 = vld [vmem:[%s0 + $0x178] sm:$0xff]
  %v62 = vld [vmem:[%s0 + $0x180] sm:$0xff]
  %v63 = vld [vmem:[%s0 + $0x188] sm:$0xff]
  %v64 = vld [vmem:[%s0 + $0x190] sm:$0xff]
  %v65 = vld [vmem:[%s0 + $0x198] sm:$0xff]
  %v66 = vld [vmem:[%s0 + $0x1a0] sm:$0xff]
  %v67 = vld [vmem:[%s0 + $0x1a8] sm:$0xff]
  %v68 = vld [vmem:[%s0 + $0x1b0] sm:$0xff]
  %v69 = vld [vmem:[%s0 + $0x1b8] sm:$0xff]
  %v70 = vld [vmem:[%s0 + $0x1c0] sm:$0xff]
  %v71 = vld [vmem:[%s0 + $0x1c8] sm:$0xff]
  %v72 = vld [vmem:[%s0 + $0x1d0] sm:$0xff]
  %v73 = vld [vmem:[%s0 + $0x1d8] sm:$0xff]
  %v74 = vld [vmem:[%s0 + $0x1e0] sm:$0xff]
  %v75 = vld [vmem:[%s0 + $0x1e8] sm:$0xff]
  %v76 = vld [vmem:[%s0 + $0x1f0] sm:$0xff]
  %v77 = vld [vmem:[%s0 + $0x1f8] sm:$0xff]
  %v78 = vld [vmem:[%s1] sm:$0xff]
  %v79 = vld [vmem:[%s2] sm:$0x1]
  %v81 = vlaneseq
  %v82 = vshrl.u32 %v81, 7
  %v83 = vsub.s32 0, %v82
  %v84 = vrot.slane %v79, %v83
  %vm86 = vcmask 64512
  %v88 = vsel %vm86, %v14, 0
  %v91 = vsel %vm86, %v15, 0
  %v94 = vsel %vm86, %v16, 0
  %v97 = vsel %vm86, %v17, 0
  %v100 = vsel %vm86, %v18, 0
  %v103 = vsel %vm86, %v19, 0
  %v106 = vsel %vm86, %v20, 0
  %v109 = vsel %vm86, %v21, 0
  %v112 = vsel %vm86, %v22, 0
  %v115 = vsel %vm86, %v23, 0
  %v118 = vsel %vm86, %v24, 0
  %v121 = vsel %vm86, %v25, 0
  %v124 = vsel %vm86, %v26, 0
  %v127 = vsel %vm86, %v27, 0
  %v130 = vsel %vm86, %v28, 0
  %v133 = vsel %vm86, %v29, 0
  %v136 = vsel %vm86, %v30, 0
  %v139 = vsel %vm86, %v31, 0
  %v142 = vsel %vm86, %v32, 0
  %v145 = vsel %vm86, %v33, 0
  %v148 = vsel %vm86, %v34, 0
  %v151 = vsel %vm86, %v35, 0
  %v154 = vsel %vm86, %v36, 0
  %v157 = vsel %vm86, %v37, 0
  %v160 = vsel %vm86, %v38, 0
  %v163 = vsel %vm86, %v39, 0
  %v166 = vsel %vm86, %v40, 0
  %v169 = vsel %vm86, %v41, 0
  %v172 = vsel %vm86, %v42, 0
  %v175 = vsel %vm86, %v43, 0
  %v178 = vsel %vm86, %v44, 0
  %v181 = vsel %vm86, %v45, 0
  %v184 = vsel %vm86, %v46, 0
  %v187 = vsel %vm86, %v47, 0
  %v190 = vsel %vm86, %v48, 0
  %v193 = vsel %vm86, %v49, 0
  %v196 = vsel %vm86, %v50, 0
  %v199 = vsel %vm86, %v51, 0
  %v202 = vsel %vm86, %v52, 0
  %v205 = vsel %vm86, %v53, 0
  %v208 = vsel %vm86, %v54, 0
  %v211 = vsel %vm86, %v55, 0
  %v214 = vsel %vm86, %v56, 0
  %v217 = vsel %vm86, %v57, 0
  %v220 = vsel %vm86, %v58, 0
  %v223 = vsel %vm86, %v59, 0
  %v226 = vsel %vm86, %v60, 0
  %v229 = vsel %vm86, %v61, 0
  %v232 = vsel %vm86, %v62, 0
  %v235 = vsel %vm86, %v63, 0
  %v238 = vsel %vm86, %v64, 0
  %v241 = vsel %vm86, %v65, 0
  %v244 = vsel %vm86, %v66, 0
  %v247 = vsel %vm86, %v67, 0
  %v250 = vsel %vm86, %v68, 0
  %v253 = vsel %vm86, %v69, 0
  %v256 = vsel %vm86, %v70, 0
  %v259 = vsel %vm86, %v71, 0
  %v262 = vsel %vm86, %v72, 0
  %v265 = vsel %vm86, %v73, 0
  %v268 = vsel %vm86, %v74, 0
  %v271 = vsel %vm86, %v75, 0
  %v274 = vsel %vm86, %v76, 0
  %v277 = vsel %vm86, %v77, 0
  %279 = vmatprep.subr.mxu0 0.0
  %280 = vmatpush1.msra.mxu0 %v78
  %281 = vmatprep.subr.mxu0 0.0
  %282 = vmatpush1.msra.mxu0 0.0
  %283 = vmatprep.subr.mxu0 0.0
  %284 = vmatpush1.msra.mxu0 0.0
  %285 = vmatprep.subr.mxu0 0.0
  %286 = vmatpush1.msra.mxu0 0.0
  %287 = vmatprep.subr.mxu0 0.0
  %288 = vmatpush1.msra.mxu0 0.0
  %289 = vmatprep.subr.mxu0 0.0
  %290 = vmatpush1.msra.mxu0 0.0
  %291 = vmatprep.subr.mxu0 0.0
  %292 = vmatpush1.msra.mxu0 0.0
  %293 = vmatprep.subr.mxu0 0.0
  %294 = vmatpush1.msra.mxu0 0.0
  %295 = vmatprep.subr.mxu0 0.0
  %296 = vmatpush1.msra.mxu0 0.0
  %297 = vmatprep.subr.mxu0 0.0
  %298 = vmatpush1.msra.mxu0 0.0
  %299 = vmatprep.subr.mxu0 0.0
  %300 = vmatpush1.msra.mxu0 0.0
  %301 = vmatprep.subr.mxu0 0.0
  %302 = vmatpush1.msra.mxu0 0.0
  %303 = vmatprep.subr.mxu0 0.0
  %304 = vmatpush1.msra.mxu0 0.0
  %305 = vmatprep.subr.mxu0 0.0
  %306 = vmatpush1.msra.mxu0 0.0
  %307 = vmatprep.subr.mxu0 0.0
  %308 = vmatpush1.msra.mxu0 0.0
  %309 = vmatprep.subr.mxu0 0.0
  %310 = vmatpush1.msra.mxu0 0.0
  %311 = vmatprep.subr.mxu0 0.0
  %312 = vmatpush1.msra.mxu0 0.0
  %313 = vmatprep.subr.mxu0 0.0
  %314 = vmatpush1.msra.mxu0 0.0
  %315 = vmatprep.subr.mxu0 0.0
  %316 = vmatpush1.msra.mxu0 0.0
  %317 = vmatprep.subr.mxu0 0.0
  %318 = vmatpush1.msra.mxu0 0.0
  %319 = vmatprep.subr.mxu0 0.0
  %320 = vmatpush1.msra.mxu0 0.0
  %321 = vmatprep.subr.mxu0 0.0
  %322 = vmatpush1.msra.mxu0 0.0
  %323 = vmatprep.subr.mxu0 0.0
  %324 = vmatpush1.msra.mxu0 0.0
  %325 = vmatprep.subr.mxu0 0.0
  %326 = vmatpush1.msra.mxu0 0.0
  %327 = vmatprep.subr.mxu0 0.0
  %328 = vmatpush1.msra.mxu0 0.0
  %329 = vmatprep.subr.mxu0 0.0
  %330 = vmatpush1.msra.mxu0 0.0
  %331 = vmatprep.subr.mxu0 0.0
  %332 = vmatpush1.msra.mxu0 0.0
  %333 = vmatprep.subr.mxu0 0.0
  %334 = vmatpush1.msra.mxu0 0.0
  %335 = vmatprep.subr.mxu0 0.0
  %336 = vmatpush1.msra.mxu0 0.0
  %337 = vmatprep.subr.mxu0 0.0
  %338 = vmatpush1.msra.mxu0 0.0
  %339 = vmatprep.subr.mxu0 0.0
  %340 = vmatpush1.msra.mxu0 0.0
  %341 = vmatprep.subr.mxu0 0.0
  %342 = vmatpush1.msra.mxu0 0.0
  %343 = vmatprep.mubr.f32.mxu0 0.0
  %344 = vmatmul.mubr.f32.gmra.mrb[0].mxu0 %v88
  %v345 = vpop.f32.mrb[0].mxu0
  %v346 = vadd.f32 %v84, %v345
  %v347 = vpop.f32.mrb[0].mxu0
  %348 = vmatprep.mubr.f32.mxu0 0.0
  %349 = vmatmul.mubr.f32.gmra.mrb[0].mxu0 %v91
  %v350 = vpop.f32.mrb[0].mxu0
  %v351 = vadd.f32 %v84, %v350
  %v352 = vpop.f32.mrb[0].mxu0
  %353 = vmatprep.mubr.f32.mxu0 0.0
  %354 = vmatmul.mubr.f32.gmra.mrb[0].mxu0 %v94
  %v355 = vpop.f32.mrb[0].mxu0
  %v356 = vadd.f32 %v84, %v355
  %v357 = vpop.f32.mrb[0].mxu0
  %358 = vmatprep.mubr.f32.mxu0 0.0
  %359 = vmatmul.mubr.f32.gmra.mrb[0].mxu0 %v97
  %v360 = vpop.f32.mrb[0].mxu0
  %v361 = vadd.f32 %v84, %v360
  %v362 = vpop.f32.mrb[0].mxu0
  %363 = vmatprep.mubr.f32.mxu0 0.0
  %364 = vmatmul.mubr.f32.gmra.mrb[0].mxu0 %v100
  %v365 = vpop.f32.mrb[0].mxu0
  %v366 = vadd.f32 %v84, %v365
  %v367 = vpop.f32.mrb[0].mxu0
  %368 = vmatprep.mubr.f32.mxu0 0.0
  %369 = vmatmul.mubr.f32.gmra.mrb[0].mxu0 %v103
  %v370 = vpop.f32.mrb[0].mxu0
  %v371 = vadd.f32 %v84, %v370
  %v372 = vpop.f32.mrb[0].mxu0
  %373 = vmatprep.mubr.f32.mxu0 0.0
  %374 = vmatmul.mubr.f32.gmra.mrb[0].mxu0 %v106
  %v375 = vpop.f32.mrb[0].mxu0
  %v376 = vadd.f32 %v84, %v375
  %v377 = vpop.f32.mrb[0].mxu0
  %378 = vmatprep.mubr.f32.mxu0 0.0
  %379 = vmatmul.mubr.f32.gmra.mrb[0].mxu0 %v109
  %v380 = vpop.f32.mrb[0].mxu0
  %v381 = vadd.f32 %v84, %v380
  %v382 = vpop.f32.mrb[0].mxu0
  %383 = vmatprep.mubr.f32.mxu0 0.0
  %384 = vmatmul.mubr.f32.gmra.mrb[0].mxu0 %v112
  %v385 = vpop.f32.mrb[0].mxu0
  %v386 = vadd.f32 %v84, %v385
  %v387 = vpop.f32.mrb[0].mxu0
  %388 = vmatprep.mubr.f32.mxu0 0.0
  %389 = vmatmul.mubr.f32.gmra.mrb[0].mxu0 %v115
  %v390 = vpop.f32.mrb[0].mxu0
  %v391 = vadd.f32 %v84, %v390
  %v392 = vpop.f32.mrb[0].mxu0
  %393 = vmatprep.mubr.f32.mxu0 0.0
  %394 = vmatmul.mubr.f32.gmra.mrb[0].mxu0 %v118
  %v395 = vpop.f32.mrb[0].mxu0
  %v396 = vadd.f32 %v84, %v395
  %v397 = vpop.f32.mrb[0].mxu0
  %398 = vmatprep.mubr.f32.mxu0 0.0
  %399 = vmatmul.mubr.f32.gmra.mrb[0].mxu0 %v121
  %v400 = vpop.f32.mrb[0].mxu0
  %v401 = vadd.f32 %v84, %v400
  %v402 = vpop.f32.mrb[0].mxu0
  %403 = vmatprep.mubr.f32.mxu0 0.0
  %404 = vmatmul.mubr.f32.gmra.mrb[0].mxu0 %v124
  %v405 = vpop.f32.mrb[0].mxu0
  %v406 = vadd.f32 %v84, %v405
  %v407 = vpop.f32.mrb[0].mxu0
  %408 = vmatprep.mubr.f32.mxu0 0.0
  %409 = vmatmul.mubr.f32.gmra.mrb[0].mxu0 %v127
  %v410 = vpop.f32.mrb[0].mxu0
  %v411 = vadd.f32 %v84, %v410
  %v412 = vpop.f32.mrb[0].mxu0
  %413 = vmatprep.mubr.f32.mxu0 0.0
  %414 = vmatmul.mubr.f32.gmra.mrb[0].mxu0 %v130
  %v415 = vpop.f32.mrb[0].mxu0
  %v416 = vadd.f32 %v84, %v415
  %v417 = vpop.f32.mrb[0].mxu0
  %418 = vmatprep.mubr.f32.mxu0 0.0
  %419 = vmatmul.mubr.f32.gmra.mrb[0].mxu0 %v133
  %v420 = vpop.f32.mrb[0].mxu0
  %v421 = vadd.f32 %v84, %v420
  %v422 = vpop.f32.mrb[0].mxu0
  %423 = vmatprep.mubr.f32.mxu0 0.0
  %424 = vmatmul.mubr.f32.gmra.mrb[0].mxu0 %v136
  %v425 = vpop.f32.mrb[0].mxu0
  %v426 = vadd.f32 %v84, %v425
  %v427 = vpop.f32.mrb[0].mxu0
  %428 = vmatprep.mubr.f32.mxu0 0.0
  %429 = vmatmul.mubr.f32.gmra.mrb[0].mxu0 %v139
  %v430 = vpop.f32.mrb[0].mxu0
  %v431 = vadd.f32 %v84, %v430
  %v432 = vpop.f32.mrb[0].mxu0
  %433 = vmatprep.mubr.f32.mxu0 0.0
  %434 = vmatmul.mubr.f32.gmra.mrb[0].mxu0 %v142
  %v435 = vpop.f32.mrb[0].mxu0
  %v436 = vadd.f32 %v84, %v435
  %v437 = vpop.f32.mrb[0].mxu0
  %438 = vmatprep.mubr.f32.mxu0 0.0
  %439 = vmatmul.mubr.f32.gmra.mrb[0].mxu0 %v145
  %v440 = vpop.f32.mrb[0].mxu0
  %v441 = vadd.f32 %v84, %v440
  %v442 = vpop.f32.mrb[0].mxu0
  %443 = vmatprep.mubr.f32.mxu0 0.0
  %444 = vmatmul.mubr.f32.gmra.mrb[0].mxu0 %v148
  %v445 = vpop.f32.mrb[0].mxu0
  %v446 = vadd.f32 %v84, %v445
  %v447 = vpop.f32.mrb[0].mxu0
  %448 = vmatprep.mubr.f32.mxu0 0.0
  %449 = vmatmul.mubr.f32.gmra.mrb[0].mxu0 %v151
  %v450 = vpop.f32.mrb[0].mxu0
  %v451 = vadd.f32 %v84, %v450
  %v452 = vpop.f32.mrb[0].mxu0
  %453 = vmatprep.mubr.f32.mxu0 0.0
  %454 = vmatmul.mubr.f32.gmra.mrb[0].mxu0 %v154
  %v455 = vpop.f32.mrb[0].mxu0
  %v456 = vadd.f32 %v84, %v455
  %v457 = vpop.f32.mrb[0].mxu0
  %458 = vmatprep.mubr.f32.mxu0 0.0
  %459 = vmatmul.mubr.f32.gmra.mrb[0].mxu0 %v157
  %v460 = vpop.f32.mrb[0].mxu0
  %v461 = vadd.f32 %v84, %v460
  %v462 = vpop.f32.mrb[0].mxu0
  %463 = vmatprep.mubr.f32.mxu0 0.0
  %464 = vmatmul.mubr.f32.gmra.mrb[0].mxu0 %v160
  %v465 = vpop.f32.mrb[0].mxu0
  %v466 = vadd.f32 %v84, %v465
  %v467 = vpop.f32.mrb[0].mxu0
  %468 = vmatprep.mubr.f32.mxu0 0.0
  %469 = vmatmul.mubr.f32.gmra.mrb[0].mxu0 %v163
  %v470 = vpop.f32.mrb[0].mxu0
  %v471 = vadd.f32 %v84, %v470
  %v472 = vpop.f32.mrb[0].mxu0
  %473 = vmatprep.mubr.f32.mxu0 0.0
  %474 = vmatmul.mubr.f32.gmra.mrb[0].mxu0 %v166
  %v475 = vpop.f32.mrb[0].mxu0
  %v476 = vadd.f32 %v84, %v475
  %v477 = vpop.f32.mrb[0].mxu0
  %478 = vmatprep.mubr.f32.mxu0 0.0
  %479 = vmatmul.mubr.f32.gmra.mrb[0].mxu0 %v169
  %v480 = vpop.f32.mrb[0].mxu0
  %v481 = vadd.f32 %v84, %v480
  %v482 = vpop.f32.mrb[0].mxu0
  %483 = vmatprep.mubr.f32.mxu0 0.0
  %484 = vmatmul.mubr.f32.gmra.mrb[0].mxu0 %v172
  %v485 = vpop.f32.mrb[0].mxu0
  %v486 = vadd.f32 %v84, %v485
  %v487 = vpop.f32.mrb[0].mxu0
  %488 = vmatprep.mubr.f32.mxu0 0.0
  %489 = vmatmul.mubr.f32.gmra.mrb[0].mxu0 %v175
  %v490 = vpop.f32.mrb[0].mxu0
  %v491 = vadd.f32 %v84, %v490
  %v492 = vpop.f32.mrb[0].mxu0
  %493 = vmatprep.mubr.f32.mxu0 0.0
  %494 = vmatmul.mubr.f32.gmra.mrb[0].mxu0 %v178
  %v495 = vpop.f32.mrb[0].mxu0
  %v496 = vadd.f32 %v84, %v495
  %v497 = vpop.f32.mrb[0].mxu0
  %498 = vmatprep.mubr.f32.mxu0 0.0
  %499 = vmatmul.mubr.f32.gmra.mrb[0].mxu0 %v181
  %v500 = vpop.f32.mrb[0].mxu0
  %v501 = vadd.f32 %v84, %v500
  %v502 = vpop.f32.mrb[0].mxu0
  %503 = vmatprep.mubr.f32.mxu0 0.0
  %504 = vmatmul.mubr.f32.gmra.mrb[0].mxu0 %v184
  %v505 = vpop.f32.mrb[0].mxu0
  %v506 = vadd.f32 %v84, %v505
  %v507 = vpop.f32.mrb[0].mxu0
  %508 = vmatprep.mubr.f32.mxu0 0.0
  %509 = vmatmul.mubr.f32.gmra.mrb[0].mxu0 %v187
  %v510 = vpop.f32.mrb[0].mxu0
  %v511 = vadd.f32 %v84, %v510
  %v512 = vpop.f32.mrb[0].mxu0
  %513 = vmatprep.mubr.f32.mxu0 0.0
  %514 = vmatmul.mubr.f32.gmra.mrb[0].mxu0 %v190
  %v515 = vpop.f32.mrb[0].mxu0
  %v516 = vadd.f32 %v84, %v515
  %v517 = vpop.f32.mrb[0].mxu0
  %518 = vmatprep.mubr.f32.mxu0 0.0
  %519 = vmatmul.mubr.f32.gmra.mrb[0].mxu0 %v193
  %v520 = vpop.f32.mrb[0].mxu0
  %v521 = vadd.f32 %v84, %v520
  %v522 = vpop.f32.mrb[0].mxu0
  %523 = vmatprep.mubr.f32.mxu0 0.0
  %524 = vmatmul.mubr.f32.gmra.mrb[0].mxu0 %v196
  %v525 = vpop.f32.mrb[0].mxu0
  %v526 = vadd.f32 %v84, %v525
  %v527 = vpop.f32.mrb[0].mxu0
  %528 = vmatprep.mubr.f32.mxu0 0.0
  %529 = vmatmul.mubr.f32.gmra.mrb[0].mxu0 %v199
  %v530 = vpop.f32.mrb[0].mxu0
  %v531 = vadd.f32 %v84, %v530
  %v532 = vpop.f32.mrb[0].mxu0
  %533 = vmatprep.mubr.f32.mxu0 0.0
  %534 = vmatmul.mubr.f32.gmra.mrb[0].mxu0 %v202
  %v535 = vpop.f32.mrb[0].mxu0
  %v536 = vadd.f32 %v84, %v535
  %v537 = vpop.f32.mrb[0].mxu0
  %538 = vmatprep.mubr.f32.mxu0 0.0
  %539 = vmatmul.mubr.f32.gmra.mrb[0].mxu0 %v205
  %v540 = vpop.f32.mrb[0].mxu0
  %v541 = vadd.f32 %v84, %v540
  %v542 = vpop.f32.mrb[0].mxu0
  %543 = vmatprep.mubr.f32.mxu0 0.0
  %544 = vmatmul.mubr.f32.gmra.mrb[0].mxu0 %v208
  %v545 = vpop.f32.mrb[0].mxu0
  %v546 = vadd.f32 %v84, %v545
  %v547 = vpop.f32.mrb[0].mxu0
  %548 = vmatprep.mubr.f32.mxu0 0.0
  %549 = vmatmul.mubr.f32.gmra.mrb[0].mxu0 %v211
  %v550 = vpop.f32.mrb[0].mxu0
  %v551 = vadd.f32 %v84, %v550
  %v552 = vpop.f32.mrb[0].mxu0
  %553 = vmatprep.mubr.f32.mxu0 0.0
  %554 = vmatmul.mubr.f32.gmra.mrb[0].mxu0 %v214
  %v555 = vpop.f32.mrb[0].mxu0
  %v556 = vadd.f32 %v84, %v555
  %v557 = vpop.f32.mrb[0].mxu0
  %558 = vmatprep.mubr.f32.mxu0 0.0
  %559 = vmatmul.mubr.f32.gmra.mrb[0].mxu0 %v217
  %v560 = vpop.f32.mrb[0].mxu0
  %v561 = vadd.f32 %v84, %v560
  %v562 = vpop.f32.mrb[0].mxu0
  %563 = vmatprep.mubr.f32.mxu0 0.0
  %564 = vmatmul.mubr.f32.gmra.mrb[0].mxu0 %v220
  %v565 = vpop.f32.mrb[0].mxu0
  %v566 = vadd.f32 %v84, %v565
  %v567 = vpop.f32.mrb[0].mxu0
  %568 = vmatprep.mubr.f32.mxu0 0.0
  %569 = vmatmul.mubr.f32.gmra.mrb[0].mxu0 %v223
  %v570 = vpop.f32.mrb[0].mxu0
  %v571 = vadd.f32 %v84, %v570
  %v572 = vpop.f32.mrb[0].mxu0
  %573 = vmatprep.mubr.f32.mxu0 0.0
  %574 = vmatmul.mubr.f32.gmra.mrb[0].mxu0 %v226
  %v575 = vpop.f32.mrb[0].mxu0
  %v576 = vadd.f32 %v84, %v575
  %v577 = vpop.f32.mrb[0].mxu0
  %578 = vmatprep.mubr.f32.mxu0 0.0
  %579 = vmatmul.mubr.f32.gmra.mrb[0].mxu0 %v229
  %v580 = vpop.f32.mrb[0].mxu0
  %v581 = vadd.f32 %v84, %v580
  %v582 = vpop.f32.mrb[0].mxu0
  %583 = vmatprep.mubr.f32.mxu0 0.0
  %584 = vmatmul.mubr.f32.gmra.mrb[0].mxu0 %v232
  %v585 = vpop.f32.mrb[0].mxu0
  %v586 = vadd.f32 %v84, %v585
  %v587 = vpop.f32.mrb[0].mxu0
  %588 = vmatprep.mubr.f32.mxu0 0.0
  %589 = vmatmul.mubr.f32.gmra.mrb[0].mxu0 %v235
  %v590 = vpop.f32.mrb[0].mxu0
  %v591 = vadd.f32 %v84, %v590
  %v592 = vpop.f32.mrb[0].mxu0
  %593 = vmatprep.mubr.f32.mxu0 0.0
  %594 = vmatmul.mubr.f32.gmra.mrb[0].mxu0 %v238
  %v595 = vpop.f32.mrb[0].mxu0
  %v596 = vadd.f32 %v84, %v595
  %v597 = vpop.f32.mrb[0].mxu0
  %598 = vmatprep.mubr.f32.mxu0 0.0
  %599 = vmatmul.mubr.f32.gmra.mrb[0].mxu0 %v241
  %v600 = vpop.f32.mrb[0].mxu0
  %v601 = vadd.f32 %v84, %v600
  %v602 = vpop.f32.mrb[0].mxu0
  %603 = vmatprep.mubr.f32.mxu0 0.0
  %604 = vmatmul.mubr.f32.gmra.mrb[0].mxu0 %v244
  %v605 = vpop.f32.mrb[0].mxu0
  %v606 = vadd.f32 %v84, %v605
  %v607 = vpop.f32.mrb[0].mxu0
  %608 = vmatprep.mubr.f32.mxu0 0.0
  %609 = vmatmul.mubr.f32.gmra.mrb[0].mxu0 %v247
  %v610 = vpop.f32.mrb[0].mxu0
  %v611 = vadd.f32 %v84, %v610
  %v612 = vpop.f32.mrb[0].mxu0
  %613 = vmatprep.mubr.f32.mxu0 0.0
  %614 = vmatmul.mubr.f32.gmra.mrb[0].mxu0 %v250
  %v615 = vpop.f32.mrb[0].mxu0
  %v616 = vadd.f32 %v84, %v615
  %v617 = vpop.f32.mrb[0].mxu0
  %618 = vmatprep.mubr.f32.mxu0 0.0
  %619 = vmatmul.mubr.f32.gmra.mrb[0].mxu0 %v253
  %v620 = vpop.f32.mrb[0].mxu0
  %v621 = vadd.f32 %v84, %v620
  %v622 = vpop.f32.mrb[0].mxu0
  %623 = vmatprep.mubr.f32.mxu0 0.0
  %624 = vmatmul.mubr.f32.gmra.mrb[0].mxu0 %v256
  %v625 = vpop.f32.mrb[0].mxu0
  %v626 = vadd.f32 %v84, %v625
  %v627 = vpop.f32.mrb[0].mxu0
  %628 = vmatprep.mubr.f32.mxu0 0.0
  %629 = vmatmul.mubr.f32.gmra.mrb[0].mxu0 %v259
  %v630 = vpop.f32.mrb[0].mxu0
  %v631 = vadd.f32 %v84, %v630
  %v632 = vpop.f32.mrb[0].mxu0
  %633 = vmatprep.mubr.f32.mxu0 0.0
  %634 = vmatmul.mubr.f32.gmra.mrb[0].mxu0 %v262
  %v635 = vpop.f32.mrb[0].mxu0
  %v636 = vadd.f32 %v84, %v635
  %v637 = vpop.f32.mrb[0].mxu0
  %638 = vmatprep.mubr.f32.mxu0 0.0
  %639 = vmatmul.mubr.f32.gmra.mrb[0].mxu0 %v265
  %v640 = vpop.f32.mrb[0].mxu0
  %v641 = vadd.f32 %v84, %v640
  %v642 = vpop.f32.mrb[0].mxu0
  %643 = vmatprep.mubr.f32.mxu0 0.0
  %644 = vmatmul.mubr.f32.gmra.mrb[0].mxu0 %v268
  %v645 = vpop.f32.mrb[0].mxu0
  %v646 = vadd.f32 %v84, %v645
  %v647 = vpop.f32.mrb[0].mxu0
  %648 = vmatprep.mubr.f32.mxu0 0.0
  %649 = vmatmul.mubr.f32.gmra.mrb[0].mxu0 %v271
  %v650 = vpop.f32.mrb[0].mxu0
  %v651 = vadd.f32 %v84, %v650
  %v652 = vpop.f32.mrb[0].mxu0
  %653 = vmatprep.mubr.f32.mxu0 0.0
  %654 = vmatmul.mubr.f32.gmra.mrb[0].mxu0 %v274
  %v655 = vpop.f32.mrb[0].mxu0
  %v656 = vadd.f32 %v84, %v655
  %v657 = vpop.f32.mrb[0].mxu0
  %658 = vmatprep.mubr.f32.mxu0 0.0
  %659 = vmatmul.mubr.f32.gmra.mrb[0].mxu0 %v277
  %v660 = vpop.f32.mrb[0].mxu0
  %v661 = vadd.f32 %v84, %v660
  %v662 = vpop.f32.mrb[0].mxu0
  %663 = vdwg.mxu0
  %v664 = vmax.f32 %v346, 0.0
  %v665 = vmax.f32 %v351, 0.0
  %v666 = vmax.f32 %v356, 0.0
  %v667 = vmax.f32 %v361, 0.0
  %v668 = vmax.f32 %v366, 0.0
  %v669 = vmax.f32 %v371, 0.0
  %v670 = vmax.f32 %v376, 0.0
  %v671 = vmax.f32 %v381, 0.0
  %v672 = vmax.f32 %v386, 0.0
  %v673 = vmax.f32 %v391, 0.0
  %v674 = vmax.f32 %v396, 0.0
  %v675 = vmax.f32 %v401, 0.0
  %v676 = vmax.f32 %v406, 0.0
  %v677 = vmax.f32 %v411, 0.0
  %v678 = vmax.f32 %v416, 0.0
  %v679 = vmax.f32 %v421, 0.0
  %v680 = vmax.f32 %v426, 0.0
  %v681 = vmax.f32 %v431, 0.0
  %v682 = vmax.f32 %v436, 0.0
  %v683 = vmax.f32 %v441, 0.0
  %v684 = vmax.f32 %v446, 0.0
  %v685 = vmax.f32 %v451, 0.0
  %v686 = vmax.f32 %v456, 0.0
  %v687 = vmax.f32 %v461, 0.0
  %v688 = vmax.f32 %v466, 0.0
  %v689 = vmax.f32 %v471, 0.0
  %v690 = vmax.f32 %v476, 0.0
  %v691 = vmax.f32 %v481, 0.0
  %v692 = vmax.f32 %v486, 0.0
  %v693 = vmax.f32 %v491, 0.0
  %v694 = vmax.f32 %v496, 0.0
  %v695 = vmax.f32 %v501, 0.0
  %v696 = vmax.f32 %v506, 0.0
  %v697 = vmax.f32 %v511, 0.0
  %v698 = vmax.f32 %v516, 0.0
  %v699 = vmax.f32 %v521, 0.0
  %v700 = vmax.f32 %v526, 0.0
  %v701 = vmax.f32 %v531, 0.0
  %v702 = vmax.f32 %v536, 0.0
  %v703 = vmax.f32 %v541, 0.0
  %v704 = vmax.f32 %v546, 0.0
  %v705 = vmax.f32 %v551, 0.0
  %v706 = vmax.f32 %v556, 0.0
  %v707 = vmax.f32 %v561, 0.0
  %v708 = vmax.f32 %v566, 0.0
  %v709 = vmax.f32 %v571, 0.0
  %v710 = vmax.f32 %v576, 0.0
  %v711 = vmax.f32 %v581, 0.0
  %v712 = vmax.f32 %v586, 0.0
  %v713 = vmax.f32 %v591, 0.0
  %v714 = vmax.f32 %v596, 0.0
  %v715 = vmax.f32 %v601, 0.0
  %v716 = vmax.f32 %v606, 0.0
  %v717 = vmax.f32 %v611, 0.0
  %v718 = vmax.f32 %v616, 0.0
  %v719 = vmax.f32 %v621, 0.0
  %v720 = vmax.f32 %v626, 0.0
  %v721 = vmax.f32 %v631, 0.0
  %v722 = vmax.f32 %v636, 0.0
  %v723 = vmax.f32 %v641, 0.0
  %v724 = vmax.f32 %v646, 0.0
  %v725 = vmax.f32 %v651, 0.0
  %v726 = vmax.f32 %v656, 0.0
  %v727 = vmax.f32 %v661, 0.0
  %v728 = vpack.c.bf16 %v665, %v664
  %v729 = vpack.c.bf16 %v667, %v666
  %v730 = vpack.c.bf16 %v669, %v668
  %v731 = vpack.c.bf16 %v671, %v670
  %v732 = vpack.c.bf16 %v673, %v672
  %v733 = vpack.c.bf16 %v675, %v674
  %v734 = vpack.c.bf16 %v677, %v676
  %v735 = vpack.c.bf16 %v679, %v678
  %v736 = vpack.c.bf16 %v681, %v680
  %v737 = vpack.c.bf16 %v683, %v682
  %v738 = vpack.c.bf16 %v685, %v684
  %v739 = vpack.c.bf16 %v687, %v686
  %v740 = vpack.c.bf16 %v689, %v688
  %v741 = vpack.c.bf16 %v691, %v690
  %v742 = vpack.c.bf16 %v693, %v692
  %v743 = vpack.c.bf16 %v695, %v694
  %v744 = vpack.c.bf16 %v697, %v696
  %v745 = vpack.c.bf16 %v699, %v698
  %v746 = vpack.c.bf16 %v701, %v700
  %v747 = vpack.c.bf16 %v703, %v702
  %v748 = vpack.c.bf16 %v705, %v704
  %v749 = vpack.c.bf16 %v707, %v706
  %v750 = vpack.c.bf16 %v709, %v708
  %v751 = vpack.c.bf16 %v711, %v710
  %v752 = vpack.c.bf16 %v713, %v712
  %v753 = vpack.c.bf16 %v715, %v714
  %v754 = vpack.c.bf16 %v717, %v716
  %v755 = vpack.c.bf16 %v719, %v718
  %v756 = vpack.c.bf16 %v721, %v720
  %v757 = vpack.c.bf16 %v723, %v722
  %v758 = vpack.c.bf16 %v725, %v724
  %v759 = vpack.c.bf16 %v727, %v726
  %v792 = vunpack.c.l.b16 %v728
  %v793 = vunpack.c.h.b16 %v728
  %v794 = vunpack.c.l.b16 %v729
  %v795 = vunpack.c.h.b16 %v729
  %v796 = vunpack.c.l.b16 %v730
  %v797 = vunpack.c.h.b16 %v730
  %v798 = vunpack.c.l.b16 %v731
  %v799 = vunpack.c.h.b16 %v731
  %v800 = vunpack.c.l.b16 %v732
  %v801 = vunpack.c.h.b16 %v732
  %v802 = vunpack.c.l.b16 %v733
  %v803 = vunpack.c.h.b16 %v733
  %v804 = vunpack.c.l.b16 %v734
  %v805 = vunpack.c.h.b16 %v734
  %v806 = vunpack.c.l.b16 %v735
  %v807 = vunpack.c.h.b16 %v735
  %v808 = vunpack.c.l.b16 %v736
  %v809 = vunpack.c.h.b16 %v736
  %v810 = vunpack.c.l.b16 %v737
  %v811 = vunpack.c.h.b16 %v737
  %v812 = vunpack.c.l.b16 %v738
  %v813 = vunpack.c.h.b16 %v738
  %v814 = vunpack.c.l.b16 %v739
  %v815 = vunpack.c.h.b16 %v739
  %v816 = vunpack.c.l.b16 %v740
  %v817 = vunpack.c.h.b16 %v740
  %v818 = vunpack.c.l.b16 %v741
  %v819 = vunpack.c.h.b16 %v741
  %v820 = vunpack.c.l.b16 %v742
  %v821 = vunpack.c.h.b16 %v742
  %v822 = vunpack.c.l.b16 %v743
  %v823 = vunpack.c.h.b16 %v743
  %v824 = vunpack.c.l.b16 %v744
  %v825 = vunpack.c.h.b16 %v744
  %v826 = vunpack.c.l.b16 %v745
  %v827 = vunpack.c.h.b16 %v745
  %v828 = vunpack.c.l.b16 %v746
  %v829 = vunpack.c.h.b16 %v746
  %v830 = vunpack.c.l.b16 %v747
  %v831 = vunpack.c.h.b16 %v747
  %v832 = vunpack.c.l.b16 %v748
  %v833 = vunpack.c.h.b16 %v748
  %v834 = vunpack.c.l.b16 %v749
  %v835 = vunpack.c.h.b16 %v749
  %v836 = vunpack.c.l.b16 %v750
  %v837 = vunpack.c.h.b16 %v750
  %v838 = vunpack.c.l.b16 %v751
  %v839 = vunpack.c.h.b16 %v751
  %v840 = vunpack.c.l.b16 %v752
  %v841 = vunpack.c.h.b16 %v752
  %v842 = vunpack.c.l.b16 %v753
  %v843 = vunpack.c.h.b16 %v753
  %v844 = vunpack.c.l.b16 %v754
  %v845 = vunpack.c.h.b16 %v754
  %v846 = vunpack.c.l.b16 %v755
  %v847 = vunpack.c.h.b16 %v755
  %v848 = vunpack.c.l.b16 %v756
  %v849 = vunpack.c.h.b16 %v756
  %v850 = vunpack.c.l.b16 %v757
  %v851 = vunpack.c.h.b16 %v757
  %v852 = vunpack.c.l.b16 %v758
  %v853 = vunpack.c.h.b16 %v758
  %v854 = vunpack.c.l.b16 %v759
  %v855 = vunpack.c.h.b16 %v759
  %v856 = vpack.c.b16 %v792, %v792
  %v857 = vpack.c.b16 %v793, %v793
  %v858 = vpack.c.b16 %v794, %v794
  %v859 = vpack.c.b16 %v795, %v795
  %v860 = vpack.c.b16 %v796, %v796
  %v861 = vpack.c.b16 %v797, %v797
  %v862 = vpack.c.b16 %v798, %v798
  %v863 = vpack.c.b16 %v799, %v799
  %v864 = vpack.c.b16 %v800, %v800
  %v865 = vpack.c.b16 %v801, %v801
  %v866 = vpack.c.b16 %v802, %v802
  %v867 = vpack.c.b16 %v803, %v803
  %v868 = vpack.c.b16 %v804, %v804
  %v869 = vpack.c.b16 %v805, %v805
  %v870 = vpack.c.b16 %v806, %v806
  %v871 = vpack.c.b16 %v807, %v807
  %v872 = vpack.c.b16 %v808, %v808
  %v873 = vpack.c.b16 %v809, %v809
  %v874 = vpack.c.b16 %v810, %v810
  %v875 = vpack.c.b16 %v811, %v811
  %v876 = vpack.c.b16 %v812, %v812
  %v877 = vpack.c.b16 %v813, %v813
  %v878 = vpack.c.b16 %v814, %v814
  %v879 = vpack.c.b16 %v815, %v815
  %v880 = vpack.c.b16 %v816, %v816
  %v881 = vpack.c.b16 %v817, %v817
  %v882 = vpack.c.b16 %v818, %v818
  %v883 = vpack.c.b16 %v819, %v819
  %v884 = vpack.c.b16 %v820, %v820
  %v885 = vpack.c.b16 %v821, %v821
  %v886 = vpack.c.b16 %v822, %v822
  %v887 = vpack.c.b16 %v823, %v823
  %v888 = vpack.c.b16 %v824, %v824
  %v889 = vpack.c.b16 %v825, %v825
  %v890 = vpack.c.b16 %v826, %v826
  %v891 = vpack.c.b16 %v827, %v827
  %v892 = vpack.c.b16 %v828, %v828
  %v893 = vpack.c.b16 %v829, %v829
  %v894 = vpack.c.b16 %v830, %v830
  %v895 = vpack.c.b16 %v831, %v831
  %v896 = vpack.c.b16 %v832, %v832
  %v897 = vpack.c.b16 %v833, %v833
  %v898 = vpack.c.b16 %v834, %v834
  %v899 = vpack.c.b16 %v835, %v835
  %v900 = vpack.c.b16 %v836, %v836
  %v901 = vpack.c.b16 %v837, %v837
  %v902 = vpack.c.b16 %v838, %v838
  %v903 = vpack.c.b16 %v839, %v839
  %v904 = vpack.c.b16 %v840, %v840
  %v905 = vpack.c.b16 %v841, %v841
  %v906 = vpack.c.b16 %v842, %v842
  %v907 = vpack.c.b16 %v843, %v843
  %v908 = vpack.c.b16 %v844, %v844
  %v909 = vpack.c.b16 %v845, %v845
  %v910 = vpack.c.b16 %v846, %v846
  %v911 = vpack.c.b16 %v847, %v847
  %v912 = vpack.c.b16 %v848, %v848
  %v913 = vpack.c.b16 %v849, %v849
  %v914 = vpack.c.b16 %v850, %v850
  %v915 = vpack.c.b16 %v851, %v851
  %v916 = vpack.c.b16 %v852, %v852
  %v917 = vpack.c.b16 %v853, %v853
  %v918 = vpack.c.b16 %v854, %v854
  %v919 = vpack.c.b16 %v855, %v855
  %vm984 = vcmask 125952
  %985 = vst.msk [vmem:[%s3] sm:$0xf] %vm984, %v856
  %986 = vst.msk [vmem:[%s3 + $0x4] sm:$0xf] %vm984, %v857
  %987 = vst.msk [vmem:[%s3 + $0x8] sm:$0xf] %vm984, %v858
  %988 = vst.msk [vmem:[%s3 + $0xc] sm:$0xf] %vm984, %v859
  %989 = vst.msk [vmem:[%s3 + $0x10] sm:$0xf] %vm984, %v860
  %990 = vst.msk [vmem:[%s3 + $0x14] sm:$0xf] %vm984, %v861
  %991 = vst.msk [vmem:[%s3 + $0x18] sm:$0xf] %vm984, %v862
  %992 = vst.msk [vmem:[%s3 + $0x1c] sm:$0xf] %vm984, %v863
  %993 = vst.msk [vmem:[%s3 + $0x20] sm:$0xf] %vm984, %v864
  %994 = vst.msk [vmem:[%s3 + $0x24] sm:$0xf] %vm984, %v865
  %995 = vst.msk [vmem:[%s3 + $0x28] sm:$0xf] %vm984, %v866
  %996 = vst.msk [vmem:[%s3 + $0x2c] sm:$0xf] %vm984, %v867
  %997 = vst.msk [vmem:[%s3 + $0x30] sm:$0xf] %vm984, %v868
  %998 = vst.msk [vmem:[%s3 + $0x34] sm:$0xf] %vm984, %v869
  %999 = vst.msk [vmem:[%s3 + $0x38] sm:$0xf] %vm984, %v870
  %1000 = vst.msk [vmem:[%s3 + $0x3c] sm:$0xf] %vm984, %v871
  %1001 = vst.msk [vmem:[%s3 + $0x40] sm:$0xf] %vm984, %v872
  %1002 = vst.msk [vmem:[%s3 + $0x44] sm:$0xf] %vm984, %v873
  %1003 = vst.msk [vmem:[%s3 + $0x48] sm:$0xf] %vm984, %v874
  %1004 = vst.msk [vmem:[%s3 + $0x4c] sm:$0xf] %vm984, %v875
  %1005 = vst.msk [vmem:[%s3 + $0x50] sm:$0xf] %vm984, %v876
  %1006 = vst.msk [vmem:[%s3 + $0x54] sm:$0xf] %vm984, %v877
  %1007 = vst.msk [vmem:[%s3 + $0x58] sm:$0xf] %vm984, %v878
  %1008 = vst.msk [vmem:[%s3 + $0x5c] sm:$0xf] %vm984, %v879
  %1009 = vst.msk [vmem:[%s3 + $0x60] sm:$0xf] %vm984, %v880
  %1010 = vst.msk [vmem:[%s3 + $0x64] sm:$0xf] %vm984, %v881
  %1011 = vst.msk [vmem:[%s3 + $0x68] sm:$0xf] %vm984, %v882
  %1012 = vst.msk [vmem:[%s3 + $0x6c] sm:$0xf] %vm984, %v883
  %1013 = vst.msk [vmem:[%s3 + $0x70] sm:$0xf] %vm984, %v884
  %1014 = vst.msk [vmem:[%s3 + $0x74] sm:$0xf] %vm984, %v885
  %1015 = vst.msk [vmem:[%s3 + $0x78] sm:$0xf] %vm984, %v886
  %1016 = vst.msk [vmem:[%s3 + $0x7c] sm:$0xf] %vm984, %v887
  %1017 = vst.msk [vmem:[%s3 + $0x80] sm:$0xf] %vm984, %v888
  %1018 = vst.msk [vmem:[%s3 + $0x84] sm:$0xf] %vm984, %v889
  %1019 = vst.msk [vmem:[%s3 + $0x88] sm:$0xf] %vm984, %v890
  %1020 = vst.msk [vmem:[%s3 + $0x8c] sm:$0xf] %vm984, %v891
  %1021 = vst.msk [vmem:[%s3 + $0x90] sm:$0xf] %vm984, %v892
  %1022 = vst.msk [vmem:[%s3 + $0x94] sm:$0xf] %vm984, %v893
  %1023 = vst.msk [vmem:[%s3 + $0x98] sm:$0xf] %vm984, %v894
  %1024 = vst.msk [vmem:[%s3 + $0x9c] sm:$0xf] %vm984, %v895
  %1025 = vst.msk [vmem:[%s3 + $0xa0] sm:$0xf] %vm984, %v896
  %1026 = vst.msk [vmem:[%s3 + $0xa4] sm:$0xf] %vm984, %v897
  %1027 = vst.msk [vmem:[%s3 + $0xa8] sm:$0xf] %vm984, %v898
  %1028 = vst.msk [vmem:[%s3 + $0xac] sm:$0xf] %vm984, %v899
  %1029 = vst.msk [vmem:[%s3 + $0xb0] sm:$0xf] %vm984, %v900
  %1030 = vst.msk [vmem:[%s3 + $0xb4] sm:$0xf] %vm984, %v901
  %1031 = vst.msk [vmem:[%s3 + $0xb8] sm:$0xf] %vm984, %v902
  %1032 = vst.msk [vmem:[%s3 + $0xbc] sm:$0xf] %vm984, %v903
  %1033 = vst.msk [vmem:[%s3 + $0xc0] sm:$0xf] %vm984, %v904
  %1034 = vst.msk [vmem:[%s3 + $0xc4] sm:$0xf] %vm984, %v905
  %1035 = vst.msk [vmem:[%s3 + $0xc8] sm:$0xf] %vm984, %v906
  %1036 = vst.msk [vmem:[%s3 + $0xcc] sm:$0xf] %vm984, %v907
  %1037 = vst.msk [vmem:[%s3 + $0xd0] sm:$0xf] %vm984, %v908
  %1038 = vst.msk [vmem:[%s3 + $0xd4] sm:$0xf] %vm984, %v909
  %1039 = vst.msk [vmem:[%s3 + $0xd8] sm:$0xf] %vm984, %v910
  %1040 = vst.msk [vmem:[%s3 + $0xdc] sm:$0xf] %vm984, %v911
  %1041 = vst.msk [vmem:[%s3 + $0xe0] sm:$0xf] %vm984, %v912
  %1042 = vst.msk [vmem:[%s3 + $0xe4] sm:$0xf] %vm984, %v913
  %1043 = vst.msk [vmem:[%s3 + $0xe8] sm:$0xf] %vm984, %v914
  %1044 = vst.msk [vmem:[%s3 + $0xec] sm:$0xf] %vm984, %v915
  %1045 = vst.msk [vmem:[%s3 + $0xf0] sm:$0xf] %vm984, %v916
  %1046 = vst.msk [vmem:[%s3 + $0xf4] sm:$0xf] %vm984, %v917
  %1047 = vst.msk [vmem:[%s3 + $0xf8] sm:$0xf] %vm984, %v918
  %1048 = vst.msk [vmem:[%s3 + $0xfc] sm:$0xf] %vm984, %v919
  // Predicated region
  $region14: #{tpu_custom_call.1} parent=0 // pred_check
    _
  $region15: #{tpu_custom_call.1} parent=0 // pred_check_branch
    %1050 = sbr.rel (0) target = $region17
  $region16: #{tpu_custom_call.1} parent=0 // pred_region
    _
  $region17: #{tpu_custom_call.1} parent=0 // pred_fallthru
    _
  // Predicated region
  $region18: #{tpu_custom_call.1} parent=0 // pred_check
    _
  $region19: #{tpu_custom_call.1} parent=0 // pred_check_branch
    %1052 = sbr.rel (0) target = $region21
  $region20: #{tpu_custom_call.1} parent=0 // pred_region
    _
  $region21: #{tpu_custom_call.1} parent=0 // pred_fallthru
    _

</llo_original>
